<compile_context>
chip_gen: v7x
topology: tpu7x:2x2x1
jax: 0.10.0
libtpu: 0.0.40
codegen_flags: <defaults>
</compile_context>

<pallas_src>
import functools

import jax
import jax.numpy as jnp
from jax.experimental import pallas as pl
from jax.experimental.pallas import tpu as pltpu


def _edge_score_kernel(src_ref, dst_ref, a_ref, b_ref, out_ref):
    """out_tile = A[src_tile] + B[dst_tile], gathered via one-hot MXU matmuls.

    src_ref/dst_ref: (tile, 1) int32 edge endpoint indices (VMEM)
    a_ref/b_ref:     (N, C) precomputed h@W_u + b  /  h@W_v   (VMEM-resident)
    out_ref:         (tile, C) edge scores
    """
    tile = src_ref.shape[0]
    n_nodes = a_ref.shape[0]

    node_ids = jax.lax.broadcasted_iota(jnp.int32, (tile, n_nodes), 1)
    onehot_u = (src_ref[...] == node_ids).astype(a_ref.dtype)   # (tile, N)
    onehot_v = (dst_ref[...] == node_ids).astype(b_ref.dtype)   # (tile, N)

    acc = jnp.dot(onehot_u, a_ref[...], preferred_element_type=jnp.float32)
    acc = acc + jnp.dot(onehot_v, b_ref[...], preferred_element_type=jnp.float32)
    out_ref[...] = acc.astype(out_ref.dtype)


@functools.partial(jax.jit, static_argnames=("edge_tile",))
def mlp_predictor_forward(h, src, dst, W, b, *, edge_tile=2048):
    """
    h:   [N, F]  node features
    src: [E]     source node index per edge
    dst: [E]     destination node index per edge
    W:   [2F, C] linear weight (x @ W convention; rows 0..F-1 act on h_u,
                 rows F..2F-1 on h_v — same as torch Linear on concat)
    b:   [C]     linear bias
    returns scores [E, C]
    """
    assert edge_tile % 8 == 0, "edge_tile must be a multiple of 8 (f32 sublanes)"
    E = src.shape[0]
    N, F = h.shape
    C = W.shape[1]

    # --- algebraic refactor: Linear distributes over the gather --------------
    # A[u] + B[v] == concat(h[u], h[v]) @ W + b
    A = h @ W[:F] + b                       # (N, C), bias folded in once
    B = h @ W[F:]                           # (N, C)

    # --- pad only the tiny index vectors to the tile boundary ---------------
    n_tiles = pl.cdiv(E, edge_tile)
    E_pad = n_tiles * edge_tile
    src_i = src.astype(jnp.int32)
    dst_i = dst.astype(jnp.int32)
    if E_pad != E:
        src_i = jnp.pad(src_i, (0, E_pad - E))   # padded edges score A[0]+B[0],
        dst_i = jnp.pad(dst_i, (0, E_pad - E))   # sliced off below
    src_col = src_i.reshape(E_pad, 1)
    dst_col = dst_i.reshape(E_pad, 1)

    out = pl.pallas_call(
        _edge_score_kernel,
        out_shape=jax.ShapeDtypeStruct((E_pad, C), h.dtype),
        grid_spec=pltpu.PrefetchScalarGridSpec(
            num_scalar_prefetch=0,
            grid=(n_tiles,),
            in_specs=[
                pl.BlockSpec((edge_tile, 1), lambda i: (i, 0)),   # src indices
                pl.BlockSpec((edge_tile, 1), lambda i: (i, 0)),   # dst indices
                pl.BlockSpec((N, C), lambda i: (0, 0)),           # A (resident)
                pl.BlockSpec((N, C), lambda i: (0, 0)),           # B (resident)
            ],
            # Dense output at true channel width C (full-dim block): ~8x fewer
            # write bytes than a 128-padded output; masked stores are cheaper
            # than the extra HBM traffic in this mem-bound regime.
            out_specs=pl.BlockSpec((edge_tile, C), lambda i: (i, 0)),
        ),
        compiler_params=pltpu.CompilerParams(
            # Single edge axis is embarrassingly parallel -> megacore sharding
            # on v7x (keep n_tiles >= ~4 at production sizes).
            dimension_semantics=("parallel",),
            # Large tiles fit v5e's 16 MiB scoped default only with an explicit
            # override; stays well under v7x's 64 MiB physical VMEM.
            vmem_limit_bytes=32 * 1024 * 1024,
        ),
    )(src_col, dst_col, A, B)

    # Drop the (tiny) edge-tail padding; no channel slice needed any more.
    return out[:E] if E_pad != E else out


if __name__ == "__main__":
    key = jax.random.PRNGKey(0)
    k_h, k_src, k_dst, k_w, k_b = jax.random.split(key, 5)

    # Small synthetic graph: N nodes, E edges, F in_features, C out_classes.
    # E is deliberately NOT a multiple of the edge tile to exercise padding,
    # and a small edge_tile is used so the demo runs several grid steps.
    N, E, F, C = 64, 1000, 32, 16

    h = jax.random.normal(k_h, (N, F), dtype=jnp.float32)
    src = jax.random.randint(k_src, (E,), 0, N, dtype=jnp.int32)
    dst = jax.random.randint(k_dst, (E,), 0, N, dtype=jnp.int32)

    # Deterministic Linear(in_features*2, out_classes) params (x @ W + b form).
    bound = 1.0 / jnp.sqrt(2.0 * F)
    W = jax.random.uniform(k_w, (2 * F, C), minval=-bound, maxval=bound,
                           dtype=jnp.float32)
    b = jax.random.uniform(k_b, (C,), minval=-bound, maxval=bound,
                           dtype=jnp.float32)

    scores = mlp_predictor_forward(h, src, dst, W, b, edge_tile=256)
    scores = jax.block_until_ready(scores)

    # Pure-JAX reference for correctness (the original concat formulation).
    ref = jnp.concatenate([h[src], h[dst]], axis=1) @ W + b
    assert scores.shape == (E, C)
    assert jnp.allclose(scores, ref, atol=1e-4, rtol=1e-4)

    print("KERNEL_OK")
</pallas_src>

<mosaic_0001>
module attributes {stable_mosaic.version = 11 : i64} {
  func.func @_edge_score_kernel(%arg0: i32, %arg1: memref<256x1xi32, #tpu.memory_space<vmem>>, %arg2: memref<256x1xi32, #tpu.memory_space<vmem>>, %arg3: memref<64x16xf32, #tpu.memory_space<vmem>>, %arg4: memref<64x16xf32, #tpu.memory_space<vmem>>, %arg5: memref<256x16xf32, #tpu.memory_space<vmem>>) attributes {dimension_semantics = [#tpu.dimension_semantics<parallel>], iteration_bounds = array<i64: 4>, scalar_prefetch = 0 : i64, scratch_operands = 0 : i64, tpu.core_type = #tpu.core_type<tc>, window_params = [{transform_indices = @transform_0, window_bounds = array<i64: 256, 1>}, {transform_indices = @transform_1, window_bounds = array<i64: 256, 1>}, {pipeline_mode = #tpu.pipeline_mode<synchronous>, transform_indices = @transform_2, window_bounds = array<i64: 64, 16>}, {pipeline_mode = #tpu.pipeline_mode<synchronous>, transform_indices = @transform_3, window_bounds = array<i64: 64, 16>}, {transform_indices = @transform_4, window_bounds = array<i64: 256, 16>}]} {
    %0 = tpu.iota {dimensions = array<i32: 1>} : vector<256x64xi32>
    %c0 = arith.constant 0 : index
    %c0_0 = arith.constant 0 : index
    %1 = vector.load %arg1[%c0, %c0_0] : memref<256x1xi32, #tpu.memory_space<vmem>>, vector<256x1xi32>
    %2 = vector.broadcast %1 : vector<256x1xi32> to vector<256x64xi32>
    %3 = arith.cmpi eq, %2, %0 : vector<256x64xi32>
    %4 = arith.extui %3 : vector<256x64xi1> to vector<256x64xi32>
    %5 = arith.sitofp %4 : vector<256x64xi32> to vector<256x64xf32>
    %c0_1 = arith.constant 0 : index
    %c0_2 = arith.constant 0 : index
    %6 = vector.load %arg2[%c0_1, %c0_2] : memref<256x1xi32, #tpu.memory_space<vmem>>, vector<256x1xi32>
    %7 = vector.broadcast %6 : vector<256x1xi32> to vector<256x64xi32>
    %8 = arith.cmpi eq, %7, %0 : vector<256x64xi32>
    %9 = arith.extui %8 : vector<256x64xi1> to vector<256x64xi32>
    %10 = arith.sitofp %9 : vector<256x64xi32> to vector<256x64xf32>
    %c0_3 = arith.constant 0 : index
    %c0_4 = arith.constant 0 : index
    %11 = vector.load %arg3[%c0_3, %c0_4] : memref<64x16xf32, #tpu.memory_space<vmem>>, vector<64x16xf32>
    %cst = arith.constant dense<0.000000e+00> : vector<256x16xf32>
    %12 = tpu.matmul %5, %11, %cst {dimension_numbers = #tpu.dot_dimension_numbers<[1], [0], [0], [1], [0, 0, 1, 1], [], []>} : vector<256x64xf32>, vector<64x16xf32>, vector<256x16xf32> -> vector<256x16xf32>
    %c0_5 = arith.constant 0 : index
    %c0_6 = arith.constant 0 : index
    %13 = vector.load %arg4[%c0_5, %c0_6] : memref<64x16xf32, #tpu.memory_space<vmem>>, vector<64x16xf32>
    %cst_7 = arith.constant dense<0.000000e+00> : vector<256x16xf32>
    %14 = tpu.matmul %10, %13, %cst_7 {dimension_numbers = #tpu.dot_dimension_numbers<[1], [0], [0], [1], [0, 0, 1, 1], [], []>} : vector<256x64xf32>, vector<64x16xf32>, vector<256x16xf32> -> vector<256x16xf32>
    %15 = arith.addf %12, %14 : vector<256x16xf32>
    %c0_8 = arith.constant 0 : index
    %c0_9 = arith.constant 0 : index
    %16 = vector.load %arg5[%c0_8, %c0_9] : memref<256x16xf32, #tpu.memory_space<vmem>>, vector<256x16xf32>
    tpu.vector_store %arg5[%c0_8, %c0_9], %15 {strides = array<i32>} : memref<256x16xf32, #tpu.memory_space<vmem>>, vector<256x16xf32>,
    return
  }
  func.func @transform_0(%arg0: i32) -> (i32, i32) {
    %c0_i32 = arith.constant 0 : i32
    %c0_i32_0 = arith.constant 0 : i32
    return %arg0, %c0_i32 : i32, i32
  }
  func.func @transform_1(%arg0: i32) -> (i32, i32) {
    %c0_i32 = arith.constant 0 : i32
    %c0_i32_0 = arith.constant 0 : i32
    return %arg0, %c0_i32 : i32, i32
  }
  func.func @transform_2(%arg0: i32) -> (i32, i32) {
    %c0_i32 = arith.constant 0 : i32
    %c0_i32_0 = arith.constant 0 : i32
    %c0_i32_1 = arith.constant 0 : i32
    return %c0_i32, %c0_i32_0 : i32, i32
  }
  func.func @transform_3(%arg0: i32) -> (i32, i32) {
    %c0_i32 = arith.constant 0 : i32
    %c0_i32_0 = arith.constant 0 : i32
    %c0_i32_1 = arith.constant 0 : i32
    return %c0_i32, %c0_i32_0 : i32, i32
  }
  func.func @transform_4(%arg0: i32) -> (i32, i32) {
    %c0_i32 = arith.constant 0 : i32
    %c0_i32_0 = arith.constant 0 : i32
    return %arg0, %c0_i32 : i32, i32
  }
}

</mosaic_0001>

<llo_original>
// kernel: mlp_predictor_forward.1
$region0: #{mlp_predictor_forward.1}
  #allocation0 [shape = 'u32[]', space=smem, size = 0x4, offset = 0x4, fixed_abs, tag = 'smem constant byte address 0x4 - core index']
  #allocation1 [shape = 'u32[144,128]{1,0:T(1,128)}', space=vmem, size = 0x12000, scoped, tag = 'internal scratch']
  %s0 = inlined_call_operand.vmem [shape: s32[1024,1], index: 0, kind: input, shape index: {}]
  %s1 = inlined_call_operand.vmem [shape: s32[1024,1], index: 1, kind: input, shape index: {}]
  %s2 = inlined_call_operand.vmem [shape: f32[64,16], index: 2, kind: input, shape index: {}]
  %s3 = inlined_call_operand.vmem [shape: f32[64,16], index: 3, kind: input, shape index: {}]
  %s4 = inlined_call_operand.vmem [shape: f32[1024,16], index: 4, kind: output, shape index: {}]
  %s5 = sld [smem:[#allocation0]]
  $region49: #{mlp_predictor_forward.1} parent=0
    _
  %s7 = ssub.s32 1, %s5
  %s8 = scalar_select 0, %s7, %s5
  loop: start=0, step=1, limit=6
  $region2: #{mlp_predictor_forward.1} parent=0 // loop_pre_header
    _
  $region3: #{mlp_predictor_forward.1} parent=0 // loop_header
    %s10 = sphi 0, %s14
    %p11 = scmp.ge.s32.totalorder %s10, 6
    %s20 = sphi 0, %s22
    %s23 = sphi 0, %s20
    %s24 = sphi 0, %s23
    %s40 = sphi 0, %s24
    %s46 = sphi 0, %s48
    %s49 = sphi 0, %s46
    %s50 = sphi 0, %s49
    %s66 = sphi 0, %s50
    %s70 = sphi 0, %s70
    %s72 = sphi 0, %s70
    %s73 = sphi 0, %s72
    %s87 = sphi 0, %s73
    %s91 = sphi 0, %s91
    %s93 = sphi 0, %s91
    %s94 = sphi 0, %s93
    %s108 = sphi 0, %s94
    %s114 = sphi 0, %s116
    %s117 = sphi 0, %s114
    %s118 = sphi 0, %s117
    %s134 = sphi 0, %s118
  $region4: #{mlp_predictor_forward.1} parent=0 // loop_header_branch
    %13 = sbr.rel (%p11) target = $region8
  $region5: #{mlp_predictor_forward.1} parent=0 // loop_body
    %s15 = ssub.s32 %s10, 1
    %s16 = ssub.s32 %s10, 2
    %s17 = sadd.s32 %s10, 1
    %s18 = ssub.s32 %s10, %s17
    %p19 = scmp.eq.s32.totalorder %s18, 0
    %s21 = sadd.s32 %s20, 1
    %s22 = scalar_select %p19, %s20, %s21
    %p25 = pneg %p19
    %p26 = scmp.eq.s32.totalorder %s10, 3
    %p27 = por %p25, %p26
    %p28 = scmp.ne.s32.totalorder %s20, %s23
    %p29 = scmp.eq.s32.totalorder %s10, 0
    %p30 = por %p28, %p29
    %p31 = scmp.ne.s32.totalorder %s20, %s23
    %p32 = scmp.eq.s32.totalorder %s15, 3
    %p33 = por %p31, %p32
    %p34 = scmp.ne.s32.totalorder %s23, %s24
    %p35 = scmp.eq.s32.totalorder %s15, 0
    %p36 = por %p34, %p35
    %p37 = scmp.ne.s32.totalorder %s23, %s24
    %p38 = scmp.eq.s32.totalorder %s16, 3
    %p39 = por %p37, %p38
    %p41 = scmp.ne.s32.totalorder %s24, %s40
    %p42 = scmp.eq.s32.totalorder %s16, 0
    %p43 = por %p41, %p42
    %s44 = ssub.s32 %s10, %s17
    %p45 = scmp.eq.s32.totalorder %s44, 0
    %s47 = sadd.s32 %s46, 1
    %s48 = scalar_select %p45, %s46, %s47
    %p51 = pneg %p45
    %p52 = scmp.eq.s32.totalorder %s10, 3
    %p53 = por %p51, %p52
    %p54 = scmp.ne.s32.totalorder %s46, %s49
    %p55 = scmp.eq.s32.totalorder %s10, 0
    %p56 = por %p54, %p55
    %p57 = scmp.ne.s32.totalorder %s46, %s49
    %p58 = scmp.eq.s32.totalorder %s15, 3
    %p59 = por %p57, %p58
    %p60 = scmp.ne.s32.totalorder %s49, %s50
    %p61 = scmp.eq.s32.totalorder %s15, 0
    %p62 = por %p60, %p61
    %p63 = scmp.ne.s32.totalorder %s49, %s50
    %p64 = scmp.eq.s32.totalorder %s16, 3
    %p65 = por %p63, %p64
    %p67 = scmp.ne.s32.totalorder %s50, %s66
    %p68 = scmp.eq.s32.totalorder %s16, 0
    %p69 = por %p67, %p68
    %s71 = sadd.s32 %s70, 1
    %p74 = scmp.eq.s32.totalorder %s10, 3
    %p75 = scmp.ne.s32.totalorder %s70, %s72
    %p76 = scmp.eq.s32.totalorder %s10, 0
    %p77 = por %p75, %p76
    %p78 = scmp.ne.s32.totalorder %s70, %s72
    %p79 = scmp.eq.s32.totalorder %s15, 3
    %p80 = por %p78, %p79
    %p81 = scmp.ne.s32.totalorder %s72, %s73
    %p82 = scmp.eq.s32.totalorder %s15, 0
    %p83 = por %p81, %p82
    %p84 = scmp.ne.s32.totalorder %s72, %s73
    %p85 = scmp.eq.s32.totalorder %s16, 3
    %p86 = por %p84, %p85
    %p88 = scmp.ne.s32.totalorder %s73, %s87
    %p89 = scmp.eq.s32.totalorder %s16, 0
    %p90 = por %p88, %p89
    %s92 = sadd.s32 %s91, 1
    %p95 = scmp.eq.s32.totalorder %s10, 3
    %p96 = scmp.ne.s32.totalorder %s91, %s93
    %p97 = scmp.eq.s32.totalorder %s10, 0
    %p98 = por %p96, %p97
    %p99 = scmp.ne.s32.totalorder %s91, %s93
    %p100 = scmp.eq.s32.totalorder %s15, 3
    %p101 = por %p99, %p100
    %p102 = scmp.ne.s32.totalorder %s93, %s94
    %p103 = scmp.eq.s32.totalorder %s15, 0
    %p104 = por %p102, %p103
    %p105 = scmp.ne.s32.totalorder %s93, %s94
    %p106 = scmp.eq.s32.totalorder %s16, 3
    %p107 = por %p105, %p106
    %p109 = scmp.ne.s32.totalorder %s94, %s108
    %p110 = scmp.eq.s32.totalorder %s16, 0
    %p111 = por %p109, %p110
    %s112 = ssub.s32 %s10, %s17
    %p113 = scmp.eq.s32.totalorder %s112, 0
    %s115 = sadd.s32 %s114, 1
    %s116 = scalar_select %p113, %s114, %s115
    %p119 = pneg %p113
    %p120 = scmp.eq.s32.totalorder %s10, 3
    %p121 = por %p119, %p120
    %p122 = scmp.ne.s32.totalorder %s114, %s117
    %p123 = scmp.eq.s32.totalorder %s10, 0
    %p124 = por %p122, %p123
    %p125 = scmp.ne.s32.totalorder %s114, %s117
    %p126 = scmp.eq.s32.totalorder %s15, 3
    %p127 = por %p125, %p126
    %p128 = scmp.ne.s32.totalorder %s117, %s118
    %p129 = scmp.eq.s32.totalorder %s15, 0
    %p130 = por %p128, %p129
    %p131 = scmp.ne.s32.totalorder %s117, %s118
    %p132 = scmp.eq.s32.totalorder %s16, 3
    %p133 = por %p131, %p132
    %p135 = scmp.ne.s32.totalorder %s118, %s134
    %p136 = scmp.eq.s32.totalorder %s16, 0
    %p137 = por %p135, %p136
    %p138 = scmp.le.s32.totalorder 1, %s10
    %p139 = scmp.lt.s32.totalorder %s10, 5
    %p140 = pnand %p138, %p139
    %p141 = pneg %p140
    // Predicated region
    $region9: #{mlp_predictor_forward.1} parent=5 // pred_check
      _
    $region10: #{mlp_predictor_forward.1} parent=5 // pred_check_branch
      %143 = sbr.rel (%p140) target = $region12
    $region11: #{mlp_predictor_forward.1} parent=5 // pred_region
      %s144 = ssub.s32 %s10, 1
      // Predicated region
      $region13: #{mlp_predictor_forward.1} parent=11 // pred_check
        %p145 = pneg %p83
      $region14: #{mlp_predictor_forward.1} parent=11 // pred_check_branch
        %147 = sbr.rel (%p145) target = $region16
      $region15: #{mlp_predictor_forward.1} parent=11 // pred_region
        _
      $region16: #{mlp_predictor_forward.1} parent=11 // pred_fallthru
        _
      // Predicated region
      $region17: #{mlp_predictor_forward.1} parent=11 // pred_check
        %p148 = pneg %p104
      $region18: #{mlp_predictor_forward.1} parent=11 // pred_check_branch
        %150 = sbr.rel (%p148) target = $region20
      $region19: #{mlp_predictor_forward.1} parent=11 // pred_region
        _
      $region20: #{mlp_predictor_forward.1} parent=11 // pred_fallthru
        _
    $region12: #{mlp_predictor_forward.1} parent=5 // pred_fallthru
      _
    %p151 = scmp.lt.s32.totalorder %s10, 4
    // Predicated region
    $region21: #{mlp_predictor_forward.1} parent=5 // pred_check
      %p152 = pneg %p151
    $region22: #{mlp_predictor_forward.1} parent=5 // pred_check_branch
      %154 = sbr.rel (%p152) target = $region24
    $region23: #{mlp_predictor_forward.1} parent=5 // pred_region
      // Predicated region
      $region25: #{mlp_predictor_forward.1} parent=23 // pred_check
        %p155 = pneg %p30
      $region26: #{mlp_predictor_forward.1} parent=23 // pred_check_branch
        %157 = sbr.rel (%p155) target = $region28
      $region27: #{mlp_predictor_forward.1} parent=23 // pred_region
        %s158 = smul.u32 32, %s10
        %p159 = scmp.lt.s32.totalorder %s158, 127
        %s160 = scalar_select %p159, %s158, 127
        %s161 = smul.addr %s160, 8
        %s162 = scalar_lea.vmem %s0, %s161
        %s163 = smul.u32 32, %s10
      $region28: #{mlp_predictor_forward.1} parent=23 // pred_fallthru
        _
      // Predicated region
      $region29: #{mlp_predictor_forward.1} parent=23 // pred_check
        %p164 = pneg %p56
      $region30: #{mlp_predictor_forward.1} parent=23 // pred_check_branch
        %166 = sbr.rel (%p164) target = $region32
      $region31: #{mlp_predictor_forward.1} parent=23 // pred_region
        %s167 = smul.u32 32, %s10
        %p168 = scmp.lt.s32.totalorder %s167, 127
        %s169 = scalar_select %p168, %s167, 127
        %s170 = smul.addr %s169, 8
        %s171 = scalar_lea.vmem %s1, %s170
        %s172 = smul.u32 32, %s10
      $region32: #{mlp_predictor_forward.1} parent=23 // pred_fallthru
        _
    $region24: #{mlp_predictor_forward.1} parent=5 // pred_fallthru
      _
    %p173 = scmp.le.s32.totalorder 1, %s10
    %p174 = scmp.lt.s32.totalorder %s10, 5
    %p175 = pnand %p173, %p174
    %p176 = pneg %p175
    // Predicated region
    $region33: #{mlp_predictor_forward.1} parent=5 // pred_check
      _
    $region34: #{mlp_predictor_forward.1} parent=5 // pred_check_branch
      %178 = sbr.rel (%p175) target = $region36
    $region35: #{mlp_predictor_forward.1} parent=5 // pred_region
      %s179 = ssub.s32 %s10, 1
      %s180 = smul.u32 32, %s15
      %p181 = scmp.lt.s32.totalorder %s180, 127
      %s182 = scalar_select %p181, %s180, 127
      %s183 = smul.addr %s182, 8
      %s184 = scalar_lea.vmem %s0, %s183
      %p185 = pneg %p36
      %p186 = pneg %p33
      %s187 = smul.u32 32, %s15
      %p188 = scmp.lt.s32.totalorder %s187, 127
      %s189 = scalar_select %p188, %s187, 127
      %s190 = smul.addr %s189, 8
      %s191 = scalar_lea.vmem %s1, %s190
      %p192 = pneg %p62
      %p193 = pneg %p59
      %p194 = pneg %p83
      %p195 = pneg %p80
      %p196 = pneg %p104
      %p197 = pneg %p101
      %p198 = pneg %p130
      %p199 = pneg %p127
      %s200 = smul.u32 32, %s15
      %p201 = scmp.lt.s32.totalorder %s200, 127
      %s202 = scalar_select %p201, %s200, 127
      %s203 = smul.addr %s202, 8
      %s204 = scalar_lea.vmem %s4, %s203
      %s205 = smul.u32 32, %s15
      %p206 = scmp.lt.s32.totalorder %s205, 127
      %s207 = scalar_select %p206, %s205, 127
      %s208 = smul.addr %s207, 8
      %s209 = scalar_lea.vmem %s0, %s208
      %s210 = smul.u32 32, %s15
      %s211 = smul.u32 32, %s15
      %p212 = scmp.lt.s32.totalorder %s211, 127
      %s213 = scalar_select %p212, %s211, 127
      %s214 = smul.addr %s213, 8
      %s215 = scalar_lea.vmem %s1, %s214
      %s216 = smul.u32 32, %s15
      %s217 = smul.u32 32, %s15
      %p218 = scmp.lt.s32.totalorder %s217, 127
      %s219 = scalar_select %p218, %s217, 127
      %s220 = smul.addr %s219, 8
      %s221 = scalar_lea.vmem %s4, %s220
      %s222 = smul.u32 32, %s15
      %v223 = vlaneseq
      %v224 = vand.u32 %v223, 127
      %v225 = vld [vmem:[%s209] sm:$0xff]
      %v226 = vld [vmem:[%s209 + $0x8] sm:$0xff]
      %v227 = vld [vmem:[%s209 + $0x10] sm:$0xff]
      %v228 = vld [vmem:[%s209 + $0x18] sm:$0xff]
      %v229 = vld [vmem:[%s209 + $0x20] sm:$0xff]
      %v230 = vld [vmem:[%s209 + $0x28] sm:$0xff]
      %v231 = vld [vmem:[%s209 + $0x30] sm:$0xff]
      %v232 = vld [vmem:[%s209 + $0x38] sm:$0xff]
      %v233 = vld [vmem:[%s209 + $0x40] sm:$0xff]
      %v234 = vld [vmem:[%s209 + $0x48] sm:$0xff]
      %v235 = vld [vmem:[%s209 + $0x50] sm:$0xff]
      %v236 = vld [vmem:[%s209 + $0x58] sm:$0xff]
      %v237 = vld [vmem:[%s209 + $0x60] sm:$0xff]
      %v238 = vld [vmem:[%s209 + $0x68] sm:$0xff]
      %v239 = vld [vmem:[%s209 + $0x70] sm:$0xff]
      %v240 = vld [vmem:[%s209 + $0x78] sm:$0xff]
      %v241 = vld [vmem:[%s209 + $0x80] sm:$0xff]
      %v242 = vld [vmem:[%s209 + $0x88] sm:$0xff]
      %v243 = vld [vmem:[%s209 + $0x90] sm:$0xff]
      %v244 = vld [vmem:[%s209 + $0x98] sm:$0xff]
      %v245 = vld [vmem:[%s209 + $0xa0] sm:$0xff]
      %v246 = vld [vmem:[%s209 + $0xa8] sm:$0xff]
      %v247 = vld [vmem:[%s209 + $0xb0] sm:$0xff]
      %v248 = vld [vmem:[%s209 + $0xb8] sm:$0xff]
      %v249 = vld [vmem:[%s209 + $0xc0] sm:$0xff]
      %v250 = vld [vmem:[%s209 + $0xc8] sm:$0xff]
      %v251 = vld [vmem:[%s209 + $0xd0] sm:$0xff]
      %v252 = vld [vmem:[%s209 + $0xd8] sm:$0xff]
      %v253 = vld [vmem:[%s209 + $0xe0] sm:$0xff]
      %v254 = vld [vmem:[%s209 + $0xe8] sm:$0xff]
      %v255 = vld [vmem:[%s209 + $0xf0] sm:$0xff]
      %v256 = vld [vmem:[%s209 + $0xf8] sm:$0xff]
      %257 = vset.pattern.permute.xlu0 0
      %258 = vperm.xlu0 %257, %v225
      %v259 = vpop.permute.xlu0 %258
      %260 = vset.pattern.permute.xlu0 0
      %261 = vperm.xlu0 %260, %v226
      %v262 = vpop.permute.xlu0 %261
      %263 = vset.pattern.permute.xlu0 0
      %264 = vperm.xlu0 %263, %v227
      %v265 = vpop.permute.xlu0 %264
      %266 = vset.pattern.permute.xlu0 0
      %267 = vperm.xlu0 %266, %v228
      %v268 = vpop.permute.xlu0 %267
      %269 = vset.pattern.permute.xlu0 0
      %270 = vperm.xlu0 %269, %v229
      %v271 = vpop.permute.xlu0 %270
      %272 = vset.pattern.permute.xlu0 0
      %273 = vperm.xlu0 %272, %v230
      %v274 = vpop.permute.xlu0 %273
      %275 = vset.pattern.permute.xlu0 0
      %276 = vperm.xlu0 %275, %v231
      %v277 = vpop.permute.xlu0 %276
      %278 = vset.pattern.permute.xlu0 0
      %279 = vperm.xlu0 %278, %v232
      %v280 = vpop.permute.xlu0 %279
      %281 = vset.pattern.permute.xlu0 0
      %282 = vperm.xlu0 %281, %v233
      %v283 = vpop.permute.xlu0 %282
      %284 = vset.pattern.permute.xlu0 0
      %285 = vperm.xlu0 %284, %v234
      %v286 = vpop.permute.xlu0 %285
      %287 = vset.pattern.permute.xlu0 0
      %288 = vperm.xlu0 %287, %v235
      %v289 = vpop.permute.xlu0 %288
      %290 = vset.pattern.permute.xlu0 0
      %291 = vperm.xlu0 %290, %v236
      %v292 = vpop.permute.xlu0 %291
      %293 = vset.pattern.permute.xlu0 0
      %294 = vperm.xlu0 %293, %v237
      %v295 = vpop.permute.xlu0 %294
      %296 = vset.pattern.permute.xlu0 0
      %297 = vperm.xlu0 %296, %v238
      %v298 = vpop.permute.xlu0 %297
      %299 = vset.pattern.permute.xlu0 0
      %300 = vperm.xlu0 %299, %v239
      %v301 = vpop.permute.xlu0 %300
      %302 = vset.pattern.permute.xlu0 0
      %303 = vperm.xlu0 %302, %v240
      %v304 = vpop.permute.xlu0 %303
      %305 = vset.pattern.permute.xlu0 0
      %306 = vperm.xlu0 %305, %v241
      %v307 = vpop.permute.xlu0 %306
      %308 = vset.pattern.permute.xlu0 0
      %309 = vperm.xlu0 %308, %v242
      %v310 = vpop.permute.xlu0 %309
      %311 = vset.pattern.permute.xlu0 0
      %312 = vperm.xlu0 %311, %v243
      %v313 = vpop.permute.xlu0 %312
      %314 = vset.pattern.permute.xlu0 0
      %315 = vperm.xlu0 %314, %v244
      %v316 = vpop.permute.xlu0 %315
      %317 = vset.pattern.permute.xlu0 0
      %318 = vperm.xlu0 %317, %v245
      %v319 = vpop.permute.xlu0 %318
      %320 = vset.pattern.permute.xlu0 0
      %321 = vperm.xlu0 %320, %v246
      %v322 = vpop.permute.xlu0 %321
      %323 = vset.pattern.permute.xlu0 0
      %324 = vperm.xlu0 %323, %v247
      %v325 = vpop.permute.xlu0 %324
      %326 = vset.pattern.permute.xlu0 0
      %327 = vperm.xlu0 %326, %v248
      %v328 = vpop.permute.xlu0 %327
      %329 = vset.pattern.permute.xlu0 0
      %330 = vperm.xlu0 %329, %v249
      %v331 = vpop.permute.xlu0 %330
      %332 = vset.pattern.permute.xlu0 0
      %333 = vperm.xlu0 %332, %v250
      %v334 = vpop.permute.xlu0 %333
      %335 = vset.pattern.permute.xlu0 0
      %336 = vperm.xlu0 %335, %v251
      %v337 = vpop.permute.xlu0 %336
      %338 = vset.pattern.permute.xlu0 0
      %339 = vperm.xlu0 %338, %v252
      %v340 = vpop.permute.xlu0 %339
      %341 = vset.pattern.permute.xlu0 0
      %342 = vperm.xlu0 %341, %v253
      %v343 = vpop.permute.xlu0 %342
      %344 = vset.pattern.permute.xlu0 0
      %345 = vperm.xlu0 %344, %v254
      %v346 = vpop.permute.xlu0 %345
      %347 = vset.pattern.permute.xlu0 0
      %348 = vperm.xlu0 %347, %v255
      %v349 = vpop.permute.xlu0 %348
      %350 = vset.pattern.permute.xlu0 0
      %351 = vperm.xlu0 %350, %v256
      %v352 = vpop.permute.xlu0 %351
      %vm353 = vcmp.eq.s32.totalorder %v259, %v224
      %vm354 = vcmp.eq.s32.totalorder %v262, %v224
      %vm355 = vcmp.eq.s32.totalorder %v265, %v224
      %vm356 = vcmp.eq.s32.totalorder %v268, %v224
      %vm357 = vcmp.eq.s32.totalorder %v271, %v224
      %vm358 = vcmp.eq.s32.totalorder %v274, %v224
      %vm359 = vcmp.eq.s32.totalorder %v277, %v224
      %vm360 = vcmp.eq.s32.totalorder %v280, %v224
      %vm361 = vcmp.eq.s32.totalorder %v283, %v224
      %vm362 = vcmp.eq.s32.totalorder %v286, %v224
      %vm363 = vcmp.eq.s32.totalorder %v289, %v224
      %vm364 = vcmp.eq.s32.totalorder %v292, %v224
      %vm365 = vcmp.eq.s32.totalorder %v295, %v224
      %vm366 = vcmp.eq.s32.totalorder %v298, %v224
      %vm367 = vcmp.eq.s32.totalorder %v301, %v224
      %vm368 = vcmp.eq.s32.totalorder %v304, %v224
      %vm369 = vcmp.eq.s32.totalorder %v307, %v224
      %vm370 = vcmp.eq.s32.totalorder %v310, %v224
      %vm371 = vcmp.eq.s32.totalorder %v313, %v224
      %vm372 = vcmp.eq.s32.totalorder %v316, %v224
      %vm373 = vcmp.eq.s32.totalorder %v319, %v224
      %vm374 = vcmp.eq.s32.totalorder %v322, %v224
      %vm375 = vcmp.eq.s32.totalorder %v325, %v224
      %vm376 = vcmp.eq.s32.totalorder %v328, %v224
      %vm377 = vcmp.eq.s32.totalorder %v331, %v224
      %vm378 = vcmp.eq.s32.totalorder %v334, %v224
      %vm379 = vcmp.eq.s32.totalorder %v337, %v224
      %vm380 = vcmp.eq.s32.totalorder %v340, %v224
      %vm381 = vcmp.eq.s32.totalorder %v343, %v224
      %vm382 = vcmp.eq.s32.totalorder %v346, %v224
      %vm383 = vcmp.eq.s32.totalorder %v349, %v224
      %vm384 = vcmp.eq.s32.totalorder %v352, %v224
      %v385 = vsel %vm353, 1, 0
      %v386 = vsel %vm354, 1, 0
      %v387 = vsel %vm355, 1, 0
      %v388 = vsel %vm356, 1, 0
      %v389 = vsel %vm357, 1, 0
      %v390 = vsel %vm358, 1, 0
      %v391 = vsel %vm359, 1, 0
      %v392 = vsel %vm360, 1, 0
      %v393 = vsel %vm361, 1, 0
      %v394 = vsel %vm362, 1, 0
      %v395 = vsel %vm363, 1, 0
      %v396 = vsel %vm364, 1, 0
      %v397 = vsel %vm365, 1, 0
      %v398 = vsel %vm366, 1, 0
      %v399 = vsel %vm367, 1, 0
      %v400 = vsel %vm368, 1, 0
      %v401 = vsel %vm369, 1, 0
      %v402 = vsel %vm370, 1, 0
      %v403 = vsel %vm371, 1, 0
      %v404 = vsel %vm372, 1, 0
      %v405 = vsel %vm373, 1, 0
      %v406 = vsel %vm374, 1, 0
      %v407 = vsel %vm375, 1, 0
      %v408 = vsel %vm376, 1, 0
      %v409 = vsel %vm377, 1, 0
      %v410 = vsel %vm378, 1, 0
      %v411 = vsel %vm379, 1, 0
      %v412 = vsel %vm380, 1, 0
      %v413 = vsel %vm381, 1, 0
      %v414 = vsel %vm382, 1, 0
      %v415 = vsel %vm383, 1, 0
      %v416 = vsel %vm384, 1, 0
      %v417 = vcvt.s32.f32 %v385
      %v418 = vcvt.s32.f32 %v386
      %v419 = vcvt.s32.f32 %v387
      %v420 = vcvt.s32.f32 %v388
      %v421 = vcvt.s32.f32 %v389
      %v422 = vcvt.s32.f32 %v390
      %v423 = vcvt.s32.f32 %v391
      %v424 = vcvt.s32.f32 %v392
      %v425 = vcvt.s32.f32 %v393
      %v426 = vcvt.s32.f32 %v394
      %v427 = vcvt.s32.f32 %v395
      %v428 = vcvt.s32.f32 %v396
      %v429 = vcvt.s32.f32 %v397
      %v430 = vcvt.s32.f32 %v398
      %v431 = vcvt.s32.f32 %v399
      %v432 = vcvt.s32.f32 %v400
      %v433 = vcvt.s32.f32 %v401
      %v434 = vcvt.s32.f32 %v402
      %v435 = vcvt.s32.f32 %v403
      %v436 = vcvt.s32.f32 %v404
      %v437 = vcvt.s32.f32 %v405
      %v438 = vcvt.s32.f32 %v406
      %v439 = vcvt.s32.f32 %v407
      %v440 = vcvt.s32.f32 %v408
      %v441 = vcvt.s32.f32 %v409
      %v442 = vcvt.s32.f32 %v410
      %v443 = vcvt.s32.f32 %v411
      %v444 = vcvt.s32.f32 %v412
      %v445 = vcvt.s32.f32 %v413
      %v446 = vcvt.s32.f32 %v414
      %v447 = vcvt.s32.f32 %v415
      %v448 = vcvt.s32.f32 %v416
      %v449 = vld [vmem:[%s215] sm:$0xff]
      %v450 = vld [vmem:[%s215 + $0x8] sm:$0xff]
      %v451 = vld [vmem:[%s215 + $0x10] sm:$0xff]
      %v452 = vld [vmem:[%s215 + $0x18] sm:$0xff]
      %v453 = vld [vmem:[%s215 + $0x20] sm:$0xff]
      %v454 = vld [vmem:[%s215 + $0x28] sm:$0xff]
      %v455 = vld [vmem:[%s215 + $0x30] sm:$0xff]
      %v456 = vld [vmem:[%s215 + $0x38] sm:$0xff]
      %v457 = vld [vmem:[%s215 + $0x40] sm:$0xff]
      %v458 = vld [vmem:[%s215 + $0x48] sm:$0xff]
      %v459 = vld [vmem:[%s215 + $0x50] sm:$0xff]
      %v460 = vld [vmem:[%s215 + $0x58] sm:$0xff]
      %v461 = vld [vmem:[%s215 + $0x60] sm:$0xff]
      %v462 = vld [vmem:[%s215 + $0x68] sm:$0xff]
      %v463 = vld [vmem:[%s215 + $0x70] sm:$0xff]
      %v464 = vld [vmem:[%s215 + $0x78] sm:$0xff]
      %v465 = vld [vmem:[%s215 + $0x80] sm:$0xff]
      %v466 = vld [vmem:[%s215 + $0x88] sm:$0xff]
      %v467 = vld [vmem:[%s215 + $0x90] sm:$0xff]
      %v468 = vld [vmem:[%s215 + $0x98] sm:$0xff]
      %v469 = vld [vmem:[%s215 + $0xa0] sm:$0xff]
      %v470 = vld [vmem:[%s215 + $0xa8] sm:$0xff]
      %v471 = vld [vmem:[%s215 + $0xb0] sm:$0xff]
      %v472 = vld [vmem:[%s215 + $0xb8] sm:$0xff]
      %v473 = vld [vmem:[%s215 + $0xc0] sm:$0xff]
      %v474 = vld [vmem:[%s215 + $0xc8] sm:$0xff]
      %v475 = vld [vmem:[%s215 + $0xd0] sm:$0xff]
      %v476 = vld [vmem:[%s215 + $0xd8] sm:$0xff]
      %v477 = vld [vmem:[%s215 + $0xe0] sm:$0xff]
      %v478 = vld [vmem:[%s215 + $0xe8] sm:$0xff]
      %v479 = vld [vmem:[%s215 + $0xf0] sm:$0xff]
      %v480 = vld [vmem:[%s215 + $0xf8] sm:$0xff]
      %481 = vset.pattern.permute.xlu0 0
      %482 = vperm.xlu0 %481, %v449
      %v483 = vpop.permute.xlu0 %482
      %484 = vset.pattern.permute.xlu0 0
      %485 = vperm.xlu0 %484, %v450
      %v486 = vpop.permute.xlu0 %485
      %487 = vset.pattern.permute.xlu0 0
      %488 = vperm.xlu0 %487, %v451
      %v489 = vpop.permute.xlu0 %488
      %490 = vset.pattern.permute.xlu0 0
      %491 = vperm.xlu0 %490, %v452
      %v492 = vpop.permute.xlu0 %491
      %493 = vset.pattern.permute.xlu0 0
      %494 = vperm.xlu0 %493, %v453
      %v495 = vpop.permute.xlu0 %494
      %496 = vset.pattern.permute.xlu0 0
      %497 = vperm.xlu0 %496, %v454
      %v498 = vpop.permute.xlu0 %497
      %499 = vset.pattern.permute.xlu0 0
      %500 = vperm.xlu0 %499, %v455
      %v501 = vpop.permute.xlu0 %500
      %502 = vset.pattern.permute.xlu0 0
      %503 = vperm.xlu0 %502, %v456
      %v504 = vpop.permute.xlu0 %503
      %505 = vset.pattern.permute.xlu0 0
      %506 = vperm.xlu0 %505, %v457
      %v507 = vpop.permute.xlu0 %506
      %508 = vset.pattern.permute.xlu0 0
      %509 = vperm.xlu0 %508, %v458
      %v510 = vpop.permute.xlu0 %509
      %511 = vset.pattern.permute.xlu0 0
      %512 = vperm.xlu0 %511, %v459
      %v513 = vpop.permute.xlu0 %512
      %514 = vset.pattern.permute.xlu0 0
      %515 = vperm.xlu0 %514, %v460
      %v516 = vpop.permute.xlu0 %515
      %517 = vset.pattern.permute.xlu0 0
      %518 = vperm.xlu0 %517, %v461
      %v519 = vpop.permute.xlu0 %518
      %520 = vset.pattern.permute.xlu0 0
      %521 = vperm.xlu0 %520, %v462
      %v522 = vpop.permute.xlu0 %521
      %523 = vset.pattern.permute.xlu0 0
      %524 = vperm.xlu0 %523, %v463
      %v525 = vpop.permute.xlu0 %524
      %526 = vset.pattern.permute.xlu0 0
      %527 = vperm.xlu0 %526, %v464
      %v528 = vpop.permute.xlu0 %527
      %529 = vset.pattern.permute.xlu0 0
      %530 = vperm.xlu0 %529, %v465
      %v531 = vpop.permute.xlu0 %530
      %532 = vset.pattern.permute.xlu0 0
      %533 = vperm.xlu0 %532, %v466
      %v534 = vpop.permute.xlu0 %533
      %535 = vset.pattern.permute.xlu0 0
      %536 = vperm.xlu0 %535, %v467
      %v537 = vpop.permute.xlu0 %536
      %538 = vset.pattern.permute.xlu0 0
      %539 = vperm.xlu0 %538, %v468
      %v540 = vpop.permute.xlu0 %539
      %541 = vset.pattern.permute.xlu0 0
      %542 = vperm.xlu0 %541, %v469
      %v543 = vpop.permute.xlu0 %542
      %544 = vset.pattern.permute.xlu0 0
      %545 = vperm.xlu0 %544, %v470
      %v546 = vpop.permute.xlu0 %545
      %547 = vset.pattern.permute.xlu0 0
      %548 = vperm.xlu0 %547, %v471
      %v549 = vpop.permute.xlu0 %548
      %550 = vset.pattern.permute.xlu0 0
      %551 = vperm.xlu0 %550, %v472
      %v552 = vpop.permute.xlu0 %551
      %553 = vset.pattern.permute.xlu0 0
      %554 = vperm.xlu0 %553, %v473
      %v555 = vpop.permute.xlu0 %554
      %556 = vset.pattern.permute.xlu0 0
      %557 = vperm.xlu0 %556, %v474
      %v558 = vpop.permute.xlu0 %557
      %559 = vset.pattern.permute.xlu0 0
      %560 = vperm.xlu0 %559, %v475
      %v561 = vpop.permute.xlu0 %560
      %562 = vset.pattern.permute.xlu0 0
      %563 = vperm.xlu0 %562, %v476
      %v564 = vpop.permute.xlu0 %563
      %565 = vset.pattern.permute.xlu0 0
      %566 = vperm.xlu0 %565, %v477
      %v567 = vpop.permute.xlu0 %566
      %568 = vset.pattern.permute.xlu0 0
      %569 = vperm.xlu0 %568, %v478
      %v570 = vpop.permute.xlu0 %569
      %571 = vset.pattern.permute.xlu0 0
      %572 = vperm.xlu0 %571, %v479
      %v573 = vpop.permute.xlu0 %572
      %574 = vset.pattern.permute.xlu0 0
      %575 = vperm.xlu0 %574, %v480
      %v576 = vpop.permute.xlu0 %575
      %vm577 = vcmp.eq.s32.totalorder %v483, %v224
      %vm578 = vcmp.eq.s32.totalorder %v486, %v224
      %vm579 = vcmp.eq.s32.totalorder %v489, %v224
      %vm580 = vcmp.eq.s32.totalorder %v492, %v224
      %vm581 = vcmp.eq.s32.totalorder %v495, %v224
      %vm582 = vcmp.eq.s32.totalorder %v498, %v224
      %vm583 = vcmp.eq.s32.totalorder %v501, %v224
      %vm584 = vcmp.eq.s32.totalorder %v504, %v224
      %vm585 = vcmp.eq.s32.totalorder %v507, %v224
      %vm586 = vcmp.eq.s32.totalorder %v510, %v224
      %vm587 = vcmp.eq.s32.totalorder %v513, %v224
      %vm588 = vcmp.eq.s32.totalorder %v516, %v224
      %vm589 = vcmp.eq.s32.totalorder %v519, %v224
      %vm590 = vcmp.eq.s32.totalorder %v522, %v224
      %vm591 = vcmp.eq.s32.totalorder %v525, %v224
      %vm592 = vcmp.eq.s32.totalorder %v528, %v224
      %vm593 = vcmp.eq.s32.totalorder %v531, %v224
      %vm594 = vcmp.eq.s32.totalorder %v534, %v224
      %vm595 = vcmp.eq.s32.totalorder %v537, %v224
      %vm596 = vcmp.eq.s32.totalorder %v540, %v224
      %vm597 = vcmp.eq.s32.totalorder %v543, %v224
      %vm598 = vcmp.eq.s32.totalorder %v546, %v224
      %vm599 = vcmp.eq.s32.totalorder %v549, %v224
      %vm600 = vcmp.eq.s32.totalorder %v552, %v224
      %vm601 = vcmp.eq.s32.totalorder %v555, %v224
      %vm602 = vcmp.eq.s32.totalorder %v558, %v224
      %vm603 = vcmp.eq.s32.totalorder %v561, %v224
      %vm604 = vcmp.eq.s32.totalorder %v564, %v224
      %vm605 = vcmp.eq.s32.totalorder %v567, %v224
      %vm606 = vcmp.eq.s32.totalorder %v570, %v224
      %vm607 = vcmp.eq.s32.totalorder %v573, %v224
      %vm608 = vcmp.eq.s32.totalorder %v576, %v224
      %v609 = vsel %vm577, 1, 0
      %v610 = vsel %vm578, 1, 0
      %v611 = vsel %vm579, 1, 0
      %v612 = vsel %vm580, 1, 0
      %v613 = vsel %vm581, 1, 0
      %v614 = vsel %vm582, 1, 0
      %v615 = vsel %vm583, 1, 0
      %v616 = vsel %vm584, 1, 0
      %v617 = vsel %vm585, 1, 0
      %v618 = vsel %vm586, 1, 0
      %v619 = vsel %vm587, 1, 0
      %v620 = vsel %vm588, 1, 0
      %v621 = vsel %vm589, 1, 0
      %v622 = vsel %vm590, 1, 0
      %v623 = vsel %vm591, 1, 0
      %v624 = vsel %vm592, 1, 0
      %v625 = vsel %vm593, 1, 0
      %v626 = vsel %vm594, 1, 0
      %v627 = vsel %vm595, 1, 0
      %v628 = vsel %vm596, 1, 0
      %v629 = vsel %vm597, 1, 0
      %v630 = vsel %vm598, 1, 0
      %v631 = vsel %vm599, 1, 0
      %v632 = vsel %vm600, 1, 0
      %v633 = vsel %vm601, 1, 0
      %v634 = vsel %vm602, 1, 0
      %v635 = vsel %vm603, 1, 0
      %v636 = vsel %vm604, 1, 0
      %v637 = vsel %vm605, 1, 0
      %v638 = vsel %vm606, 1, 0
      %v639 = vsel %vm607, 1, 0
      %v640 = vsel %vm608, 1, 0
      %v641 = vcvt.s32.f32 %v609
      %v642 = vcvt.s32.f32 %v610
      %v643 = vcvt.s32.f32 %v611
      %v644 = vcvt.s32.f32 %v612
      %v645 = vcvt.s32.f32 %v613
      %v646 = vcvt.s32.f32 %v614
      %v647 = vcvt.s32.f32 %v615
      %v648 = vcvt.s32.f32 %v616
      %v649 = vcvt.s32.f32 %v617
      %v650 = vcvt.s32.f32 %v618
      %v651 = vcvt.s32.f32 %v619
      %v652 = vcvt.s32.f32 %v620
      %v653 = vcvt.s32.f32 %v621
      %v654 = vcvt.s32.f32 %v622
      %v655 = vcvt.s32.f32 %v623
      %v656 = vcvt.s32.f32 %v624
      %v657 = vcvt.s32.f32 %v625
      %v658 = vcvt.s32.f32 %v626
      %v659 = vcvt.s32.f32 %v627
      %v660 = vcvt.s32.f32 %v628
      %v661 = vcvt.s32.f32 %v629
      %v662 = vcvt.s32.f32 %v630
      %v663 = vcvt.s32.f32 %v631
      %v664 = vcvt.s32.f32 %v632
      %v665 = vcvt.s32.f32 %v633
      %v666 = vcvt.s32.f32 %v634
      %v667 = vcvt.s32.f32 %v635
      %v668 = vcvt.s32.f32 %v636
      %v669 = vcvt.s32.f32 %v637
      %v670 = vcvt.s32.f32 %v638
      %v671 = vcvt.s32.f32 %v639
      %v672 = vcvt.s32.f32 %v640
      %v673 = vld [vmem:[%s2] sm:$0xff]
      %v674 = vld [vmem:[%s2 + $0x8] sm:$0xff]
      %v675 = vld [vmem:[%s2 + $0x10] sm:$0xff]
      %v676 = vld [vmem:[%s2 + $0x18] sm:$0xff]
      %v677 = vld [vmem:[%s2 + $0x20] sm:$0xff]
      %v678 = vld [vmem:[%s2 + $0x28] sm:$0xff]
      %v679 = vld [vmem:[%s2 + $0x30] sm:$0xff]
      %v680 = vld [vmem:[%s2 + $0x38] sm:$0xff]
      %v681 = vld [vmem:[%s3] sm:$0xff]
      %v682 = vld [vmem:[%s3 + $0x8] sm:$0xff]
      %v683 = vld [vmem:[%s3 + $0x10] sm:$0xff]
      %v684 = vld [vmem:[%s3 + $0x18] sm:$0xff]
      %v685 = vld [vmem:[%s3 + $0x20] sm:$0xff]
      %v686 = vld [vmem:[%s3 + $0x28] sm:$0xff]
      %v687 = vld [vmem:[%s3 + $0x30] sm:$0xff]
      %v688 = vld [vmem:[%s3 + $0x38] sm:$0xff]
      %vm689 = vcmask 523264
      %v691 = vsel %vm689, %v641, 0
      %v694 = vsel %vm689, %v642, 0
      %v697 = vsel %vm689, %v643, 0
      %v700 = vsel %vm689, %v644, 0
      %v703 = vsel %vm689, %v645, 0
      %v706 = vsel %vm689, %v646, 0
      %v709 = vsel %vm689, %v647, 0
      %v712 = vsel %vm689, %v648, 0
      %v715 = vsel %vm689, %v649, 0
      %v718 = vsel %vm689, %v650, 0
      %v721 = vsel %vm689, %v651, 0
      %v724 = vsel %vm689, %v652, 0
      %v727 = vsel %vm689, %v653, 0
      %v730 = vsel %vm689, %v654, 0
      %v733 = vsel %vm689, %v655, 0
      %v736 = vsel %vm689, %v656, 0
      %v739 = vsel %vm689, %v657, 0
      %v742 = vsel %vm689, %v658, 0
      %v745 = vsel %vm689, %v659, 0
      %v748 = vsel %vm689, %v660, 0
      %v751 = vsel %vm689, %v661, 0
      %v754 = vsel %vm689, %v662, 0
      %v757 = vsel %vm689, %v663, 0
      %v760 = vsel %vm689, %v664, 0
      %v763 = vsel %vm689, %v665, 0
      %v766 = vsel %vm689, %v666, 0
      %v769 = vsel %vm689, %v667, 0
      %v772 = vsel %vm689, %v668, 0
      %v775 = vsel %vm689, %v669, 0
      %v778 = vsel %vm689, %v670, 0
      %v781 = vsel %vm689, %v671, 0
      %v784 = vsel %vm689, %v672, 0
      %786 = vmatprep.subr.mxu0 0.0
      %787 = vmatpush1.msra.mxu0 %v681
      %788 = vmatprep.subr.mxu0 0.0
      %789 = vmatpush1.msra.mxu0 %v682
      %790 = vmatprep.subr.mxu0 0.0
      %791 = vmatpush1.msra.mxu0 %v683
      %792 = vmatprep.subr.mxu0 0.0
      %793 = vmatpush1.msra.mxu0 %v684
      %794 = vmatprep.subr.mxu0 0.0
      %795 = vmatpush1.msra.mxu0 %v685
      %796 = vmatprep.subr.mxu0 0.0
      %797 = vmatpush1.msra.mxu0 %v686
      %798 = vmatprep.subr.mxu0 0.0
      %799 = vmatpush1.msra.mxu0 %v687
      %800 = vmatprep.subr.mxu0 0.0
      %801 = vmatpush1.msra.mxu0 %v688
      %802 = vmatprep.subr.mxu0 0.0
      %803 = vmatpush1.msra.mxu0 0.0
      %804 = vmatprep.subr.mxu0 0.0
      %805 = vmatpush1.msra.mxu0 0.0
      %806 = vmatprep.subr.mxu0 0.0
      %807 = vmatpush1.msra.mxu0 0.0
      %808 = vmatprep.subr.mxu0 0.0
      %809 = vmatpush1.msra.mxu0 0.0
      %810 = vmatprep.subr.mxu0 0.0
      %811 = vmatpush1.msra.mxu0 0.0
      %812 = vmatprep.subr.mxu0 0.0
      %813 = vmatpush1.msra.mxu0 0.0
      %814 = vmatprep.subr.mxu0 0.0
      %815 = vmatpush1.msra.mxu0 0.0
      %816 = vmatprep.subr.mxu0 0.0
      %817 = vmatpush1.msra.mxu0 0.0
      %818 = vmatprep.subr.mxu0 0.0
      %819 = vmatpush1.msra.mxu0 0.0
      %820 = vmatprep.subr.mxu0 0.0
      %821 = vmatpush1.msra.mxu0 0.0
      %822 = vmatprep.subr.mxu0 0.0
      %823 = vmatpush1.msra.mxu0 0.0
      %824 = vmatprep.subr.mxu0 0.0
      %825 = vmatpush1.msra.mxu0 0.0
      %826 = vmatprep.subr.mxu0 0.0
      %827 = vmatpush1.msra.mxu0 0.0
      %828 = vmatprep.subr.mxu0 0.0
      %829 = vmatpush1.msra.mxu0 0.0
      %830 = vmatprep.subr.mxu0 0.0
      %831 = vmatpush1.msra.mxu0 0.0
      %832 = vmatprep.subr.mxu0 0.0
      %833 = vmatpush1.msra.mxu0 0.0
      %834 = vmatprep.subr.mxu0 0.0
      %835 = vmatpush1.msra.mxu0 0.0
      %836 = vmatprep.subr.mxu0 0.0
      %837 = vmatpush1.msra.mxu0 0.0
      %838 = vmatprep.subr.mxu0 0.0
      %839 = vmatpush1.msra.mxu0 0.0
      %840 = vmatprep.subr.mxu0 0.0
      %841 = vmatpush1.msra.mxu0 0.0
      %842 = vmatprep.subr.mxu0 0.0
      %843 = vmatpush1.msra.mxu0 0.0
      %844 = vmatprep.subr.mxu0 0.0
      %845 = vmatpush1.msra.mxu0 0.0
      %846 = vmatprep.subr.mxu0 0.0
      %847 = vmatpush1.msra.mxu0 0.0
      %848 = vmatprep.subr.mxu0 0.0
      %849 = vmatpush1.msra.mxu0 0.0
      %850 = vmatprep.mubr.f32.mxu0 0.0
      %851 = vmatmul.mubr.f32.gmra.mrb[0].mxu0 %v691
      %v852 = vpop.f32.mrb[0].mxu0
      %v853 = vadd.f32 0.0, %v852
      %v854 = vpop.f32.mrb[0].mxu0
      %855 = vmatprep.mubr.f32.mxu0 0.0
      %856 = vmatmul.mubr.f32.gmra.mrb[0].mxu0 %v694
      %v857 = vpop.f32.mrb[0].mxu0
      %v858 = vadd.f32 0.0, %v857
      %v859 = vpop.f32.mrb[0].mxu0
      %860 = vmatprep.mubr.f32.mxu0 0.0
      %861 = vmatmul.mubr.f32.gmra.mrb[0].mxu0 %v697
      %v862 = vpop.f32.mrb[0].mxu0
      %v863 = vadd.f32 0.0, %v862
      %v864 = vpop.f32.mrb[0].mxu0
      %865 = vmatprep.mubr.f32.mxu0 0.0
      %866 = vmatmul.mubr.f32.gmra.mrb[0].mxu0 %v700
      %v867 = vpop.f32.mrb[0].mxu0
      %v868 = vadd.f32 0.0, %v867
      %v869 = vpop.f32.mrb[0].mxu0
      %870 = vmatprep.mubr.f32.mxu0 0.0
      %871 = vmatmul.mubr.f32.gmra.mrb[0].mxu0 %v703
      %v872 = vpop.f32.mrb[0].mxu0
      %v873 = vadd.f32 0.0, %v872
      %v874 = vpop.f32.mrb[0].mxu0
      %875 = vmatprep.mubr.f32.mxu0 0.0
      %876 = vmatmul.mubr.f32.gmra.mrb[0].mxu0 %v706
      %v877 = vpop.f32.mrb[0].mxu0
      %v878 = vadd.f32 0.0, %v877
      %v879 = vpop.f32.mrb[0].mxu0
      %880 = vmatprep.mubr.f32.mxu0 0.0
      %881 = vmatmul.mubr.f32.gmra.mrb[0].mxu0 %v709
      %v882 = vpop.f32.mrb[0].mxu0
      %v883 = vadd.f32 0.0, %v882
      %v884 = vpop.f32.mrb[0].mxu0
      %885 = vmatprep.mubr.f32.mxu0 0.0
      %886 = vmatmul.mubr.f32.gmra.mrb[0].mxu0 %v712
      %v887 = vpop.f32.mrb[0].mxu0
      %v888 = vadd.f32 0.0, %v887
      %v889 = vpop.f32.mrb[0].mxu0
      %890 = vmatprep.mubr.f32.mxu0 0.0
      %891 = vmatmul.mubr.f32.gmra.mrb[0].mxu0 %v715
      %v892 = vpop.f32.mrb[0].mxu0
      %v893 = vadd.f32 0.0, %v892
      %v894 = vpop.f32.mrb[0].mxu0
      %895 = vmatprep.mubr.f32.mxu0 0.0
      %896 = vmatmul.mubr.f32.gmra.mrb[0].mxu0 %v718
      %v897 = vpop.f32.mrb[0].mxu0
      %v898 = vadd.f32 0.0, %v897
      %v899 = vpop.f32.mrb[0].mxu0
      %900 = vmatprep.mubr.f32.mxu0 0.0
      %901 = vmatmul.mubr.f32.gmra.mrb[0].mxu0 %v721
      %v902 = vpop.f32.mrb[0].mxu0
      %v903 = vadd.f32 0.0, %v902
      %v904 = vpop.f32.mrb[0].mxu0
      %905 = vmatprep.mubr.f32.mxu0 0.0
      %906 = vmatmul.mubr.f32.gmra.mrb[0].mxu0 %v724
      %v907 = vpop.f32.mrb[0].mxu0
      %v908 = vadd.f32 0.0, %v907
      %v909 = vpop.f32.mrb[0].mxu0
      %910 = vmatprep.mubr.f32.mxu0 0.0
      %911 = vmatmul.mubr.f32.gmra.mrb[0].mxu0 %v727
      %v912 = vpop.f32.mrb[0].mxu0
      %v913 = vadd.f32 0.0, %v912
      %v914 = vpop.f32.mrb[0].mxu0
      %915 = vmatprep.mubr.f32.mxu0 0.0
      %916 = vmatmul.mubr.f32.gmra.mrb[0].mxu0 %v730
      %v917 = vpop.f32.mrb[0].mxu0
      %v918 = vadd.f32 0.0, %v917
      %v919 = vpop.f32.mrb[0].mxu0
      %920 = vmatprep.mubr.f32.mxu0 0.0
      %921 = vmatmul.mubr.f32.gmra.mrb[0].mxu0 %v733
      %v922 = vpop.f32.mrb[0].mxu0
      %v923 = vadd.f32 0.0, %v922
      %v924 = vpop.f32.mrb[0].mxu0
      %925 = vmatprep.mubr.f32.mxu0 0.0
      %926 = vmatmul.mubr.f32.gmra.mrb[0].mxu0 %v736
      %v927 = vpop.f32.mrb[0].mxu0
      %v928 = vadd.f32 0.0, %v927
      %v929 = vpop.f32.mrb[0].mxu0
      %930 = vmatprep.mubr.f32.mxu0 0.0
      %931 = vmatmul.mubr.f32.gmra.mrb[0].mxu0 %v739
      %v932 = vpop.f32.mrb[0].mxu0
      %v933 = vadd.f32 0.0, %v932
      %v934 = vpop.f32.mrb[0].mxu0
      %935 = vmatprep.mubr.f32.mxu0 0.0
      %936 = vmatmul.mubr.f32.gmra.mrb[0].mxu0 %v742
      %v937 = vpop.f32.mrb[0].mxu0
      %v938 = vadd.f32 0.0, %v937
      %v939 = vpop.f32.mrb[0].mxu0
      %940 = vmatprep.mubr.f32.mxu0 0.0
      %941 = vmatmul.mubr.f32.gmra.mrb[0].mxu0 %v745
      %v942 = vpop.f32.mrb[0].mxu0
      %v943 = vadd.f32 0.0, %v942
      %v944 = vpop.f32.mrb[0].mxu0
      %945 = vmatprep.mubr.f32.mxu0 0.0
      %946 = vmatmul.mubr.f32.gmra.mrb[0].mxu0 %v748
      %v947 = vpop.f32.mrb[0].mxu0
      %v948 = vadd.f32 0.0, %v947
      %v949 = vpop.f32.mrb[0].mxu0
      %950 = vmatprep.mubr.f32.mxu0 0.0
      %951 = vmatmul.mubr.f32.gmra.mrb[0].mxu0 %v751
      %v952 = vpop.f32.mrb[0].mxu0
      %v953 = vadd.f32 0.0, %v952
      %v954 = vpop.f32.mrb[0].mxu0
      %955 = vmatprep.mubr.f32.mxu0 0.0
      %956 = vmatmul.mubr.f32.gmra.mrb[0].mxu0 %v754
      %v957 = vpop.f32.mrb[0].mxu0
      %v958 = vadd.f32 0.0, %v957
      %v959 = vpop.f32.mrb[0].mxu0
      %960 = vmatprep.mubr.f32.mxu0 0.0
      %961 = vmatmul.mubr.f32.gmra.mrb[0].mxu0 %v757
      %v962 = vpop.f32.mrb[0].mxu0
      %v963 = vadd.f32 0.0, %v962
      %v964 = vpop.f32.mrb[0].mxu0
      %965 = vmatprep.mubr.f32.mxu0 0.0
      %966 = vmatmul.mubr.f32.gmra.mrb[0].mxu0 %v760
      %v967 = vpop.f32.mrb[0].mxu0
      %v968 = vadd.f32 0.0, %v967
      %v969 = vpop.f32.mrb[0].mxu0
      %970 = vmatprep.mubr.f32.mxu0 0.0
      %971 = vmatmul.mubr.f32.gmra.mrb[0].mxu0 %v763
      %v972 = vpop.f32.mrb[0].mxu0
      %v973 = vadd.f32 0.0, %v972
      %v974 = vpop.f32.mrb[0].mxu0
      %975 = vmatprep.mubr.f32.mxu0 0.0
      %976 = vmatmul.mubr.f32.gmra.mrb[0].mxu0 %v766
      %v977 = vpop.f32.mrb[0].mxu0
      %v978 = vadd.f32 0.0, %v977
      %v979 = vpop.f32.mrb[0].mxu0
      %980 = vmatprep.mubr.f32.mxu0 0.0
      %981 = vmatmul.mubr.f32.gmra.mrb[0].mxu0 %v769
      %v982 = vpop.f32.mrb[0].mxu0
      %v983 = vadd.f32 0.0, %v982
      %v984 = vpop.f32.mrb[0].mxu0
      %985 = vmatprep.mubr.f32.mxu0 0.0
      %986 = vmatmul.mubr.f32.gmra.mrb[0].mxu0 %v772
      %v987 = vpop.f32.mrb[0].mxu0
      %v988 = vadd.f32 0.0, %v987
      %v989 = vpop.f32.mrb[0].mxu0
      %990 = vmatprep.mubr.f32.mxu0 0.0
      %991 = vmatmul.mubr.f32.gmra.mrb[0].mxu0 %v775
      %v992 = vpop.f32.mrb[0].mxu0
      %v993 = vadd.f32 0.0, %v992
      %v994 = vpop.f32.mrb[0].mxu0
      %995 = vmatprep.mubr.f32.mxu0 0.0
      %996 = vmatmul.mubr.f32.gmra.mrb[0].mxu0 %v778
      %v997 = vpop.f32.mrb[0].mxu0
      %v998 = vadd.f32 0.0, %v997
      %v999 = vpop.f32.mrb[0].mxu0
      %1000 = vmatprep.mubr.f32.mxu0 0.0
      %1001 = vmatmul.mubr.f32.gmra.mrb[0].mxu0 %v781
      %v1002 = vpop.f32.mrb[0].mxu0
      %v1003 = vadd.f32 0.0, %v1002
      %v1004 = vpop.f32.mrb[0].mxu0
      %1005 = vmatprep.mubr.f32.mxu0 0.0
      %1006 = vmatmul.mubr.f32.gmra.mrb[0].mxu0 %v784
      %v1007 = vpop.f32.mrb[0].mxu0
      %v1008 = vadd.f32 0.0, %v1007
      %v1009 = vpop.f32.mrb[0].mxu0
      %1010 = vdwg.mxu0
      %v1012 = vsel %vm689, %v417, 0
      %v1015 = vsel %vm689, %v418, 0
      %v1018 = vsel %vm689, %v419, 0
      %v1021 = vsel %vm689, %v420, 0
      %v1024 = vsel %vm689, %v421, 0
      %v1027 = vsel %vm689, %v422, 0
      %v1030 = vsel %vm689, %v423, 0
      %v1033 = vsel %vm689, %v424, 0
      %v1036 = vsel %vm689, %v425, 0
      %v1039 = vsel %vm689, %v426, 0
      %v1042 = vsel %vm689, %v427, 0
      %v1045 = vsel %vm689, %v428, 0
      %v1048 = vsel %vm689, %v429, 0
      %v1051 = vsel %vm689, %v430, 0
      %v1054 = vsel %vm689, %v431, 0
      %v1057 = vsel %vm689, %v432, 0
      %v1060 = vsel %vm689, %v433, 0
      %v1063 = vsel %vm689, %v434, 0
      %v1066 = vsel %vm689, %v435, 0
      %v1069 = vsel %vm689, %v436, 0
      %v1072 = vsel %vm689, %v437, 0
      %v1075 = vsel %vm689, %v438, 0
      %v1078 = vsel %vm689, %v439, 0
      %v1081 = vsel %vm689, %v440, 0
      %v1084 = vsel %vm689, %v441, 0
      %v1087 = vsel %vm689, %v442, 0
      %v1090 = vsel %vm689, %v443, 0
      %v1093 = vsel %vm689, %v444, 0
      %v1096 = vsel %vm689, %v445, 0
      %v1099 = vsel %vm689, %v446, 0
      %v1102 = vsel %vm689, %v447, 0
      %v1105 = vsel %vm689, %v448, 0
      %1107 = vmatprep.subr.mxu0 0.0
      %1108 = vmatpush1.msra.mxu0 %v673
      %1109 = vmatprep.subr.mxu0 0.0
      %1110 = vmatpush1.msra.mxu0 %v674
      %1111 = vmatprep.subr.mxu0 0.0
      %1112 = vmatpush1.msra.mxu0 %v675
      %1113 = vmatprep.subr.mxu0 0.0
      %1114 = vmatpush1.msra.mxu0 %v676
      %1115 = vmatprep.subr.mxu0 0.0
      %1116 = vmatpush1.msra.mxu0 %v677
      %1117 = vmatprep.subr.mxu0 0.0
      %1118 = vmatpush1.msra.mxu0 %v678
      %1119 = vmatprep.subr.mxu0 0.0
      %1120 = vmatpush1.msra.mxu0 %v679
      %1121 = vmatprep.subr.mxu0 0.0
      %1122 = vmatpush1.msra.mxu0 %v680
      %1123 = vmatprep.subr.mxu0 0.0
      %1124 = vmatpush1.msra.mxu0 0.0
      %1125 = vmatprep.subr.mxu0 0.0
      %1126 = vmatpush1.msra.mxu0 0.0
      %1127 = vmatprep.subr.mxu0 0.0
      %1128 = vmatpush1.msra.mxu0 0.0
      %1129 = vmatprep.subr.mxu0 0.0
      %1130 = vmatpush1.msra.mxu0 0.0
      %1131 = vmatprep.subr.mxu0 0.0
      %1132 = vmatpush1.msra.mxu0 0.0
      %1133 = vmatprep.subr.mxu0 0.0
      %1134 = vmatpush1.msra.mxu0 0.0
      %1135 = vmatprep.subr.mxu0 0.0
      %1136 = vmatpush1.msra.mxu0 0.0
      %1137 = vmatprep.subr.mxu0 0.0
      %1138 = vmatpush1.msra.mxu0 0.0
      %1139 = vmatprep.subr.mxu0 0.0
      %1140 = vmatpush1.msra.mxu0 0.0
      %1141 = vmatprep.subr.mxu0 0.0
      %1142 = vmatpush1.msra.mxu0 0.0
      %1143 = vmatprep.subr.mxu0 0.0
      %1144 = vmatpush1.msra.mxu0 0.0
      %1145 = vmatprep.subr.mxu0 0.0
      %1146 = vmatpush1.msra.mxu0 0.0
      %1147 = vmatprep.subr.mxu0 0.0
      %1148 = vmatpush1.msra.mxu0 0.0
      %1149 = vmatprep.subr.mxu0 0.0
      %1150 = vmatpush1.msra.mxu0 0.0
      %1151 = vmatprep.subr.mxu0 0.0
      %1152 = vmatpush1.msra.mxu0 0.0
      %1153 = vmatprep.subr.mxu0 0.0
      %1154 = vmatpush1.msra.mxu0 0.0
      %1155 = vmatprep.subr.mxu0 0.0
      %1156 = vmatpush1.msra.mxu0 0.0
      %1157 = vmatprep.subr.mxu0 0.0
      %1158 = vmatpush1.msra.mxu0 0.0
      %1159 = vmatprep.subr.mxu0 0.0
      %1160 = vmatpush1.msra.mxu0 0.0
      %1161 = vmatprep.subr.mxu0 0.0
      %1162 = vmatpush1.msra.mxu0 0.0
      %1163 = vmatprep.subr.mxu0 0.0
      %1164 = vmatpush1.msra.mxu0 0.0
      %1165 = vmatprep.subr.mxu0 0.0
      %1166 = vmatpush1.msra.mxu0 0.0
      %1167 = vmatprep.subr.mxu0 0.0
      %1168 = vmatpush1.msra.mxu0 0.0
      %1169 = vmatprep.subr.mxu0 0.0
      %1170 = vmatpush1.msra.mxu0 0.0
      %1171 = vmatprep.mubr.f32.mxu0 0.0
      %1172 = vmatmul.mubr.f32.gmra.mrb[0].mxu0 %v1012
      %v1173 = vpop.f32.mrb[0].mxu0
      %v1174 = vadd.f32 %v853, %v1173
      %v1175 = vpop.f32.mrb[0].mxu0
      %1176 = vmatprep.mubr.f32.mxu0 0.0
      %1177 = vmatmul.mubr.f32.gmra.mrb[0].mxu0 %v1015
      %v1178 = vpop.f32.mrb[0].mxu0
      %v1179 = vadd.f32 %v858, %v1178
      %v1180 = vpop.f32.mrb[0].mxu0
      %1181 = vmatprep.mubr.f32.mxu0 0.0
      %1182 = vmatmul.mubr.f32.gmra.mrb[0].mxu0 %v1018
      %v1183 = vpop.f32.mrb[0].mxu0
      %v1184 = vadd.f32 %v863, %v1183
      %v1185 = vpop.f32.mrb[0].mxu0
      %1186 = vmatprep.mubr.f32.mxu0 0.0
      %1187 = vmatmul.mubr.f32.gmra.mrb[0].mxu0 %v1021
      %v1188 = vpop.f32.mrb[0].mxu0
      %v1189 = vadd.f32 %v868, %v1188
      %v1190 = vpop.f32.mrb[0].mxu0
      %1191 = vmatprep.mubr.f32.mxu0 0.0
      %1192 = vmatmul.mubr.f32.gmra.mrb[0].mxu0 %v1024
      %v1193 = vpop.f32.mrb[0].mxu0
      %v1194 = vadd.f32 %v873, %v1193
      %v1195 = vpop.f32.mrb[0].mxu0
      %1196 = vmatprep.mubr.f32.mxu0 0.0
      %1197 = vmatmul.mubr.f32.gmra.mrb[0].mxu0 %v1027
      %v1198 = vpop.f32.mrb[0].mxu0
      %v1199 = vadd.f32 %v878, %v1198
      %v1200 = vpop.f32.mrb[0].mxu0
      %1201 = vmatprep.mubr.f32.mxu0 0.0
      %1202 = vmatmul.mubr.f32.gmra.mrb[0].mxu0 %v1030
      %v1203 = vpop.f32.mrb[0].mxu0
      %v1204 = vadd.f32 %v883, %v1203
      %v1205 = vpop.f32.mrb[0].mxu0
      %1206 = vmatprep.mubr.f32.mxu0 0.0
      %1207 = vmatmul.mubr.f32.gmra.mrb[0].mxu0 %v1033
      %v1208 = vpop.f32.mrb[0].mxu0
      %v1209 = vadd.f32 %v888, %v1208
      %v1210 = vpop.f32.mrb[0].mxu0
      %1211 = vmatprep.mubr.f32.mxu0 0.0
      %1212 = vmatmul.mubr.f32.gmra.mrb[0].mxu0 %v1036
      %v1213 = vpop.f32.mrb[0].mxu0
      %v1214 = vadd.f32 %v893, %v1213
      %v1215 = vpop.f32.mrb[0].mxu0
      %1216 = vmatprep.mubr.f32.mxu0 0.0
      %1217 = vmatmul.mubr.f32.gmra.mrb[0].mxu0 %v1039
      %v1218 = vpop.f32.mrb[0].mxu0
      %v1219 = vadd.f32 %v898, %v1218
      %v1220 = vpop.f32.mrb[0].mxu0
      %1221 = vmatprep.mubr.f32.mxu0 0.0
      %1222 = vmatmul.mubr.f32.gmra.mrb[0].mxu0 %v1042
      %v1223 = vpop.f32.mrb[0].mxu0
      %v1224 = vadd.f32 %v903, %v1223
      %v1225 = vpop.f32.mrb[0].mxu0
      %1226 = vmatprep.mubr.f32.mxu0 0.0
      %1227 = vmatmul.mubr.f32.gmra.mrb[0].mxu0 %v1045
      %v1228 = vpop.f32.mrb[0].mxu0
      %v1229 = vadd.f32 %v908, %v1228
      %v1230 = vpop.f32.mrb[0].mxu0
      %1231 = vmatprep.mubr.f32.mxu0 0.0
      %1232 = vmatmul.mubr.f32.gmra.mrb[0].mxu0 %v1048
      %v1233 = vpop.f32.mrb[0].mxu0
      %v1234 = vadd.f32 %v913, %v1233
      %v1235 = vpop.f32.mrb[0].mxu0
      %1236 = vmatprep.mubr.f32.mxu0 0.0
      %1237 = vmatmul.mubr.f32.gmra.mrb[0].mxu0 %v1051
      %v1238 = vpop.f32.mrb[0].mxu0
      %v1239 = vadd.f32 %v918, %v1238
      %v1240 = vpop.f32.mrb[0].mxu0
      %1241 = vmatprep.mubr.f32.mxu0 0.0
      %1242 = vmatmul.mubr.f32.gmra.mrb[0].mxu0 %v1054
      %v1243 = vpop.f32.mrb[0].mxu0
      %v1244 = vadd.f32 %v923, %v1243
      %v1245 = vpop.f32.mrb[0].mxu0
      %1246 = vmatprep.mubr.f32.mxu0 0.0
      %1247 = vmatmul.mubr.f32.gmra.mrb[0].mxu0 %v1057
      %v1248 = vpop.f32.mrb[0].mxu0
      %v1249 = vadd.f32 %v928, %v1248
      %v1250 = vpop.f32.mrb[0].mxu0
      %1251 = vmatprep.mubr.f32.mxu0 0.0
      %1252 = vmatmul.mubr.f32.gmra.mrb[0].mxu0 %v1060
      %v1253 = vpop.f32.mrb[0].mxu0
      %v1254 = vadd.f32 %v933, %v1253
      %v1255 = vpop.f32.mrb[0].mxu0
      %1256 = vmatprep.mubr.f32.mxu0 0.0
      %1257 = vmatmul.mubr.f32.gmra.mrb[0].mxu0 %v1063
      %v1258 = vpop.f32.mrb[0].mxu0
      %v1259 = vadd.f32 %v938, %v1258
      %v1260 = vpop.f32.mrb[0].mxu0
      %1261 = vmatprep.mubr.f32.mxu0 0.0
      %1262 = vmatmul.mubr.f32.gmra.mrb[0].mxu0 %v1066
      %v1263 = vpop.f32.mrb[0].mxu0
      %v1264 = vadd.f32 %v943, %v1263
      %v1265 = vpop.f32.mrb[0].mxu0
      %1266 = vmatprep.mubr.f32.mxu0 0.0
      %1267 = vmatmul.mubr.f32.gmra.mrb[0].mxu0 %v1069
      %v1268 = vpop.f32.mrb[0].mxu0
      %v1269 = vadd.f32 %v948, %v1268
      %v1270 = vpop.f32.mrb[0].mxu0
      %1271 = vmatprep.mubr.f32.mxu0 0.0
      %1272 = vmatmul.mubr.f32.gmra.mrb[0].mxu0 %v1072
      %v1273 = vpop.f32.mrb[0].mxu0
      %v1274 = vadd.f32 %v953, %v1273
      %v1275 = vpop.f32.mrb[0].mxu0
      %1276 = vmatprep.mubr.f32.mxu0 0.0
      %1277 = vmatmul.mubr.f32.gmra.mrb[0].mxu0 %v1075
      %v1278 = vpop.f32.mrb[0].mxu0
      %v1279 = vadd.f32 %v958, %v1278
      %v1280 = vpop.f32.mrb[0].mxu0
      %1281 = vmatprep.mubr.f32.mxu0 0.0
      %1282 = vmatmul.mubr.f32.gmra.mrb[0].mxu0 %v1078
      %v1283 = vpop.f32.mrb[0].mxu0
      %v1284 = vadd.f32 %v963, %v1283
      %v1285 = vpop.f32.mrb[0].mxu0
      %1286 = vmatprep.mubr.f32.mxu0 0.0
      %1287 = vmatmul.mubr.f32.gmra.mrb[0].mxu0 %v1081
      %v1288 = vpop.f32.mrb[0].mxu0
      %v1289 = vadd.f32 %v968, %v1288
      %v1290 = vpop.f32.mrb[0].mxu0
      %1291 = vmatprep.mubr.f32.mxu0 0.0
      %1292 = vmatmul.mubr.f32.gmra.mrb[0].mxu0 %v1084
      %v1293 = vpop.f32.mrb[0].mxu0
      %v1294 = vadd.f32 %v973, %v1293
      %v1295 = vpop.f32.mrb[0].mxu0
      %1296 = vmatprep.mubr.f32.mxu0 0.0
      %1297 = vmatmul.mubr.f32.gmra.mrb[0].mxu0 %v1087
      %v1298 = vpop.f32.mrb[0].mxu0
      %v1299 = vadd.f32 %v978, %v1298
      %v1300 = vpop.f32.mrb[0].mxu0
      %1301 = vmatprep.mubr.f32.mxu0 0.0
      %1302 = vmatmul.mubr.f32.gmra.mrb[0].mxu0 %v1090
      %v1303 = vpop.f32.mrb[0].mxu0
      %v1304 = vadd.f32 %v983, %v1303
      %v1305 = vpop.f32.mrb[0].mxu0
      %1306 = vmatprep.mubr.f32.mxu0 0.0
      %1307 = vmatmul.mubr.f32.gmra.mrb[0].mxu0 %v1093
      %v1308 = vpop.f32.mrb[0].mxu0
      %v1309 = vadd.f32 %v988, %v1308
      %v1310 = vpop.f32.mrb[0].mxu0
      %1311 = vmatprep.mubr.f32.mxu0 0.0
      %1312 = vmatmul.mubr.f32.gmra.mrb[0].mxu0 %v1096
      %v1313 = vpop.f32.mrb[0].mxu0
      %v1314 = vadd.f32 %v993, %v1313
      %v1315 = vpop.f32.mrb[0].mxu0
      %1316 = vmatprep.mubr.f32.mxu0 0.0
      %1317 = vmatmul.mubr.f32.gmra.mrb[0].mxu0 %v1099
      %v1318 = vpop.f32.mrb[0].mxu0
      %v1319 = vadd.f32 %v998, %v1318
      %v1320 = vpop.f32.mrb[0].mxu0
      %1321 = vmatprep.mubr.f32.mxu0 0.0
      %1322 = vmatmul.mubr.f32.gmra.mrb[0].mxu0 %v1102
      %v1323 = vpop.f32.mrb[0].mxu0
      %v1324 = vadd.f32 %v1003, %v1323
      %v1325 = vpop.f32.mrb[0].mxu0
      %1326 = vmatprep.mubr.f32.mxu0 0.0
      %1327 = vmatmul.mubr.f32.gmra.mrb[0].mxu0 %v1105
      %v1328 = vpop.f32.mrb[0].mxu0
      %v1329 = vadd.f32 %v1008, %v1328
      %v1330 = vpop.f32.mrb[0].mxu0
      %1331 = vdwg.mxu0
      %vm1332 = vcmask 130048
      %1333 = vst.msk [vmem:[%s221] sm:$0xff] %vm1332, %v1174
      %1334 = vst.msk [vmem:[%s221 + $0x8] sm:$0xff] %vm1332, %v1179
      %1335 = vst.msk [vmem:[%s221 + $0x10] sm:$0xff] %vm1332, %v1184
      %1336 = vst.msk [vmem:[%s221 + $0x18] sm:$0xff] %vm1332, %v1189
      %1337 = vst.msk [vmem:[%s221 + $0x20] sm:$0xff] %vm1332, %v1194
      %1338 = vst.msk [vmem:[%s221 + $0x28] sm:$0xff] %vm1332, %v1199
      %1339 = vst.msk [vmem:[%s221 + $0x30] sm:$0xff] %vm1332, %v1204
      %1340 = vst.msk [vmem:[%s221 + $0x38] sm:$0xff] %vm1332, %v1209
      %1341 = vst.msk [vmem:[%s221 + $0x40] sm:$0xff] %vm1332, %v1214
      %1342 = vst.msk [vmem:[%s221 + $0x48] sm:$0xff] %vm1332, %v1219
      %1343 = vst.msk [vmem:[%s221 + $0x50] sm:$0xff] %vm1332, %v1224
      %1344 = vst.msk [vmem:[%s221 + $0x58] sm:$0xff] %vm1332, %v1229
      %1345 = vst.msk [vmem:[%s221 + $0x60] sm:$0xff] %vm1332, %v1234
      %1346 = vst.msk [vmem:[%s221 + $0x68] sm:$0xff] %vm1332, %v1239
      %1347 = vst.msk [vmem:[%s221 + $0x70] sm:$0xff] %vm1332, %v1244
      %1348 = vst.msk [vmem:[%s221 + $0x78] sm:$0xff] %vm1332, %v1249
      %1349 = vst.msk [vmem:[%s221 + $0x80] sm:$0xff] %vm1332, %v1254
      %1350 = vst.msk [vmem:[%s221 + $0x88] sm:$0xff] %vm1332, %v1259
      %1351 = vst.msk [vmem:[%s221 + $0x90] sm:$0xff] %vm1332, %v1264
      %1352 = vst.msk [vmem:[%s221 + $0x98] sm:$0xff] %vm1332, %v1269
      %1353 = vst.msk [vmem:[%s221 + $0xa0] sm:$0xff] %vm1332, %v1274
      %1354 = vst.msk [vmem:[%s221 + $0xa8] sm:$0xff] %vm1332, %v1279
      %1355 = vst.msk [vmem:[%s221 + $0xb0] sm:$0xff] %vm1332, %v1284
      %1356 = vst.msk [vmem:[%s221 + $0xb8] sm:$0xff] %vm1332, %v1289
      %1357 = vst.msk [vmem:[%s221 + $0xc0] sm:$0xff] %vm1332, %v1294
      %1358 = vst.msk [vmem:[%s221 + $0xc8] sm:$0xff] %vm1332, %v1299
      %1359 = vst.msk [vmem:[%s221 + $0xd0] sm:$0xff] %vm1332, %v1304
      %1360 = vst.msk [vmem:[%s221 + $0xd8] sm:$0xff] %vm1332, %v1309
      %1361 = vst.msk [vmem:[%s221 + $0xe0] sm:$0xff] %vm1332, %v1314
      %1362 = vst.msk [vmem:[%s221 + $0xe8] sm:$0xff] %vm1332, %v1319
      %1363 = vst.msk [vmem:[%s221 + $0xf0] sm:$0xff] %vm1332, %v1324
      %1364 = vst.msk [vmem:[%s221 + $0xf8] sm:$0xff] %vm1332, %v1329
      %s1365 = smul.u32 32, %s15
      %p1366 = scmp.lt.s32.totalorder %s1365, 127
      %s1367 = scalar_select %p1366, %s1365, 127
      %s1368 = smul.addr %s1367, 8
      %s1369 = scalar_lea.vmem %s4, %s1368
      // Predicated region
      $region37: #{mlp_predictor_forward.1} parent=35 // pred_check
        %p1370 = pneg %p127
      $region38: #{mlp_predictor_forward.1} parent=35 // pred_check_branch
        %1372 = sbr.rel (%p1370) target = $region40
      $region39: #{mlp_predictor_forward.1} parent=35 // pred_region
        %s1373 = smul.u32 32, %s15
      $region40: #{mlp_predictor_forward.1} parent=35 // pred_fallthru
        _
    $region36: #{mlp_predictor_forward.1} parent=5 // pred_fallthru
      _
    %p1374 = scmp.le.s32.totalorder 2, %s10
    // Predicated region
    $region41: #{mlp_predictor_forward.1} parent=5 // pred_check
      %p1375 = pneg %p1374
    $region42: #{mlp_predictor_forward.1} parent=5 // pred_check_branch
      %1377 = sbr.rel (%p1375) target = $region44
    $region43: #{mlp_predictor_forward.1} parent=5 // pred_region
      %s1378 = ssub.s32 %s10, 2
      // Predicated region
      $region45: #{mlp_predictor_forward.1} parent=43 // pred_check
        %p1379 = pneg %p133
      $region46: #{mlp_predictor_forward.1} parent=43 // pred_check_branch
        %1381 = sbr.rel (%p1379) target = $region48
      $region47: #{mlp_predictor_forward.1} parent=43 // pred_region
        %s1382 = smul.u32 32, %s16
        %p1383 = scmp.lt.s32.totalorder %s1382, 127
        %s1384 = scalar_select %p1383, %s1382, 127
        %s1385 = smul.addr %s1384, 8
        %s1386 = scalar_lea.vmem %s4, %s1385
      $region48: #{mlp_predictor_forward.1} parent=43 // pred_fallthru
        _
    $region44: #{mlp_predictor_forward.1} parent=5 // pred_fallthru
      _
  $region6: #{mlp_predictor_forward.1} parent=0 // loop_footer
    %s14 = sadd.s32 1, %s10
  $region7: #{mlp_predictor_forward.1} parent=0 // loop_footer_branch
    %9 = sbr.rel target = $region3
  $region8: #{mlp_predictor_forward.1} parent=0 // loop_exit
    _

</llo_original>
